<compile_context>
chip_gen: v7x
topology: tpu7x:2x2x1
jax: 0.10.0
libtpu: 0.0.40
codegen_flags: <defaults>
</compile_context>

<pallas_src>
import jax
import jax.numpy as jnp
from jax.experimental import pallas as pl
from jax.experimental.pallas import tpu as pltpu

_LANE = 128
_SUBLANE = 8


def _round_down(x, m):
    return (x // m) * m


def _ddpm_forward_kernel(a_ref, b_ref, x_ref, eta_ref, out_ref):
    # a_ref / b_ref:            (tn, 1) f32 per-batch scales (lane-broadcast).
    # x_ref / eta_ref / out_ref: (tn, tp) tiles.
    a = a_ref[...]
    b = b_ref[...]
    x = x_ref[...].astype(jnp.float32)
    e = eta_ref[...].astype(jnp.float32)
    out_ref[...] = (a * x + b * e).astype(out_ref.dtype)


def ddpm_forward(x, t, eta, alpha_bar, *, target_tile_bytes=1 << 20):
    """Pallas implementation of ContextDDPM.forward.

    x, eta:    (N, C, H, W) float32 or bfloat16 (NCHW like PyTorch).
    t:         (N,) int32 timestep indices.
    alpha_bar: (n_steps,) float32 cumulative alpha products.
    """
    n, c, h, w = x.shape
    p = c * h * w
    out_dtype = x.dtype
    itemsize = jnp.dtype(x.dtype).itemsize

    # Per-batch scale factors (tiny, computed in f32 outside the kernel).
    ab_t = alpha_bar[t].astype(jnp.float32)                # (N,)
    sqrt_ab = jnp.sqrt(ab_t).reshape(n, 1)                 # (N, 1)
    sqrt_1mab = jnp.sqrt(1.0 - ab_t).reshape(n, 1)         # (N, 1)

    # Contiguous 2D views (free reshapes, no copies).
    x2 = x.reshape(n, p)
    eta2 = eta.reshape(n, p)

    # ---- tile-size selection (~target_tile_bytes per operand tile) ----
    target_elems = max(_LANE, target_tile_bytes // itemsize)
    min_tn = n if n < _SUBLANE else _SUBLANE

    tp_budget = max(_LANE, target_elems // min_tn)
    if p <= tp_budget:
        tp = p                                   # full last dim: any P legal
    else:
        tp = _round_down(tp_budget, _LANE)       # lane-dense chunks of P
    num_p_blocks = pl.cdiv(p, tp)

    tn_budget = max(min_tn, target_elems // tp)
    if n <= tn_budget:
        tn = n                                   # full batch dim
    else:
        tn = max(_SUBLANE, _round_down(tn_budget, _SUBLANE))
    num_n_blocks = pl.cdiv(n, tn)

    data_block = (tn, tp)
    data_idx = lambda i, j: (i, j)
    scale_block = (tn, 1)
    scale_idx = lambda i, j: (i, 0)

    cost = pl.CostEstimate(
        flops=3 * n * p,
        transcendentals=0,
        bytes_accessed=3 * n * p * itemsize + 2 * n * 4,
    )

    out2 = pl.pallas_call(
        _ddpm_forward_kernel,
        out_shape=jax.ShapeDtypeStruct((n, p), out_dtype),
        grid=(num_n_blocks, num_p_blocks),
        in_specs=[
            pl.BlockSpec(scale_block, scale_idx),
            pl.BlockSpec(scale_block, scale_idx),
            pl.BlockSpec(data_block, data_idx),
            pl.BlockSpec(data_block, data_idx),
        ],
        out_specs=pl.BlockSpec(data_block, data_idx),
        compiler_params=pltpu.CompilerParams(
            dimension_semantics=("parallel", "parallel")),
        cost_estimate=cost,
    )(sqrt_ab, sqrt_1mab, x2, eta2)

    return out2.reshape(n, c, h, w)


def make_ddpm_schedule(n_steps=1000, min_beta=1e-4, max_beta=0.02):
    betas = jnp.linspace(min_beta, max_beta, n_steps, dtype=jnp.float32)
    alphas = 1.0 - betas
    alpha_bar = jnp.cumprod(alphas, axis=0)
    return betas, alphas, alpha_bar


def _reference(x, t, eta, alpha_bar):
    n = x.shape[0]
    ab_t = alpha_bar[t].astype(jnp.float32)
    out = (jnp.sqrt(ab_t).reshape(n, 1, 1, 1) * x.astype(jnp.float32)
           + jnp.sqrt(1.0 - ab_t).reshape(n, 1, 1, 1) * eta.astype(jnp.float32))
    return out.astype(x.dtype)


if __name__ == "__main__":
    # TODO(synk): eta=None path (torch.randn) and the denoising loops
    # (show_sample / generate_*) involve the external `network`; only the
    # forward noising step is implemented here, with eta supplied by the caller.
    key = jax.random.PRNGKey(0)
    n_steps = 1000
    _, _, alpha_bar = make_ddpm_schedule(n_steps)

    # Case 1: small NCHW example, lane-aligned slab (batch=2, channels=4, 16x16).
    k1, k2, k3, key = jax.random.split(key, 4)
    N, C, H, W = 2, 4, 16, 16
    x = jax.random.normal(k1, (N, C, H, W), dtype=jnp.float32)
    eta = jax.random.normal(k2, (N, C, H, W), dtype=jnp.float32)
    t = jax.random.randint(k3, (N,), 0, n_steps, dtype=jnp.int32)

    out = jax.block_until_ready(ddpm_forward(x, t, eta, alpha_bar))
    ref = _reference(x, t, eta, alpha_bar)
    assert out.shape == (N, C, H, W)
    assert jnp.allclose(out, ref, atol=1e-6, rtol=1e-6)

    # Case 2: MNIST-like shape (2, 3, 28, 28) — P = 2352 (not a 128 multiple),
    # exercises the full-last-dim path with no host padding.
    k1, k2, k3, key = jax.random.split(key, 4)
    N2, C2, H2, W2 = 2, 3, 28, 28
    x2 = jax.random.normal(k1, (N2, C2, H2, W2), dtype=jnp.float32)
    eta2 = jax.random.normal(k2, (N2, C2, H2, W2), dtype=jnp.float32)
    t2 = jax.random.randint(k3, (N2,), 0, n_steps, dtype=jnp.int32)

    out2 = jax.block_until_ready(ddpm_forward(x2, t2, eta2, alpha_bar))
    ref2 = _reference(x2, t2, eta2, alpha_bar)
    assert out2.shape == (N2, C2, H2, W2)
    assert jnp.allclose(out2, ref2, atol=1e-6, rtol=1e-6)

    # Case 3: larger batch (10, 1, 28, 28) in bf16 — multi-row blocks, non-8
    # batch dim handled via full-dim block, mixed-precision cast path.
    k1, k2, k3, key = jax.random.split(key, 4)
    N3, C3, H3, W3 = 10, 1, 28, 28
    x3 = jax.random.normal(k1, (N3, C3, H3, W3), dtype=jnp.bfloat16)
    eta3 = jax.random.normal(k2, (N3, C3, H3, W3), dtype=jnp.bfloat16)
    t3 = jax.random.randint(k3, (N3,), 0, n_steps, dtype=jnp.int32)

    out3 = jax.block_until_ready(ddpm_forward(x3, t3, eta3, alpha_bar))
    ref3 = _reference(x3, t3, eta3, alpha_bar)
    assert out3.shape == (N3, C3, H3, W3)
    assert jnp.allclose(out3.astype(jnp.float32), ref3.astype(jnp.float32),
                        atol=2e-2, rtol=2e-2)

    print("KERNEL_OK")
</pallas_src>

<mosaic_0001>
module attributes {stable_mosaic.version = 11 : i64} {
  func.func @_ddpm_forward_kernel(%arg0: i32, %arg1: i32, %arg2: memref<2x1xf32, #tpu.memory_space<vmem>>, %arg3: memref<2x1xf32, #tpu.memory_space<vmem>>, %arg4: memref<2x1024xf32, #tpu.memory_space<vmem>>, %arg5: memref<2x1024xf32, #tpu.memory_space<vmem>>, %arg6: memref<2x1024xf32, #tpu.memory_space<vmem>>) attributes {dimension_semantics = [#tpu.dimension_semantics<parallel>, #tpu.dimension_semantics<parallel>], iteration_bounds = array<i64: 1, 1>, scalar_prefetch = 0 : i64, scratch_operands = 0 : i64, tpu.core_type = #tpu.core_type<tc>, window_params = [{transform_indices = @transform_0, window_bounds = array<i64: 2, 1>}, {transform_indices = @transform_1, window_bounds = array<i64: 2, 1>}, {transform_indices = @transform_2, window_bounds = array<i64: 2, 1024>}, {transform_indices = @transform_3, window_bounds = array<i64: 2, 1024>}, {transform_indices = @transform_4, window_bounds = array<i64: 2, 1024>}]} {
    %c0 = arith.constant 0 : index
    %c0_0 = arith.constant 0 : index
    %0 = vector.load %arg2[%c0, %c0_0] : memref<2x1xf32, #tpu.memory_space<vmem>>, vector<2x1xf32>
    %c0_1 = arith.constant 0 : index
    %c0_2 = arith.constant 0 : index
    %1 = vector.load %arg3[%c0_1, %c0_2] : memref<2x1xf32, #tpu.memory_space<vmem>>, vector<2x1xf32>
    %c0_3 = arith.constant 0 : index
    %c0_4 = arith.constant 0 : index
    %2 = vector.load %arg4[%c0_3, %c0_4] : memref<2x1024xf32, #tpu.memory_space<vmem>>, vector<2x1024xf32>
    %c0_5 = arith.constant 0 : index
    %c0_6 = arith.constant 0 : index
    %3 = vector.load %arg5[%c0_5, %c0_6] : memref<2x1024xf32, #tpu.memory_space<vmem>>, vector<2x1024xf32>
    %4 = vector.broadcast %0 : vector<2x1xf32> to vector<2x1024xf32>
    %5 = arith.mulf %4, %2 : vector<2x1024xf32>
    %6 = vector.broadcast %1 : vector<2x1xf32> to vector<2x1024xf32>
    %7 = arith.mulf %6, %3 : vector<2x1024xf32>
    %8 = arith.addf %5, %7 : vector<2x1024xf32>
    %c0_7 = arith.constant 0 : index
    %c0_8 = arith.constant 0 : index
    %9 = vector.load %arg6[%c0_7, %c0_8] : memref<2x1024xf32, #tpu.memory_space<vmem>>, vector<2x1024xf32>
    tpu.vector_store %arg6[%c0_7, %c0_8], %8 {strides = array<i32>} : memref<2x1024xf32, #tpu.memory_space<vmem>>, vector<2x1024xf32>,
    return
  }
  func.func @transform_0(%arg0: i32, %arg1: i32) -> (i32, i32) {
    %c0_i32 = arith.constant 0 : i32
    %c0_i32_0 = arith.constant 0 : i32
    return %arg0, %c0_i32 : i32, i32
  }
  func.func @transform_1(%arg0: i32, %arg1: i32) -> (i32, i32) {
    %c0_i32 = arith.constant 0 : i32
    %c0_i32_0 = arith.constant 0 : i32
    return %arg0, %c0_i32 : i32, i32
  }
  func.func @transform_2(%arg0: i32, %arg1: i32) -> (i32, i32) {
    %c0_i32 = arith.constant 0 : i32
    return %arg0, %arg1 : i32, i32
  }
  func.func @transform_3(%arg0: i32, %arg1: i32) -> (i32, i32) {
    %c0_i32 = arith.constant 0 : i32
    return %arg0, %arg1 : i32, i32
  }
  func.func @transform_4(%arg0: i32, %arg1: i32) -> (i32, i32) {
    %c0_i32 = arith.constant 0 : i32
    return %arg0, %arg1 : i32, i32
  }
}

</mosaic_0001>

<llo_original>
// kernel: tpu_custom_call.1
$region0: #{tpu_custom_call.1}
  #allocation0 [shape = 'u32[]', space=smem, size = 0x4, offset = 0x4, fixed_abs, tag = 'smem constant byte address 0x4 - core index']
  #allocation1 [shape = 'u32[144,128]{1,0:T(1,128)}', space=vmem, size = 0x12000, scoped, tag = 'internal scratch']
  %s0 = inlined_call_operand.vmem [shape: f32[2,1], index: 0, kind: input, shape index: {}]
  %s1 = inlined_call_operand.vmem [shape: f32[2,1], index: 1, kind: input, shape index: {}]
  %s2 = inlined_call_operand.hbm [shape: f32[2,1024], index: 2, kind: input, shape index: {}]
  %s3 = inlined_call_operand.vmem [shape: f32[2,1024], index: 3, kind: input, shape index: {}]
  %s4 = inlined_call_operand.hbm [shape: f32[2,1024], index: 4, kind: output, shape index: {}]
  %s5 = sld [smem:[#allocation0]]
  $region30: #{tpu_custom_call.1} parent=0
    _
  %s7 = ssub.s32 1, %s5
  %s8 = scalar_select 0, %s7, %s5
  $region1: #{tpu_custom_call.1} parent=0
    #allocation2 [shape = 'u8[8192]{0}', space=vmem, size = 0x2000, scoped, tag = 'input window, operand 2, single buffered']
    #allocation3 [shape = 's32[1]{0}', space=sflag, size = 0x4, scoped, tag = 'scoped memory for tpu_custom_call.1']
    #allocation4 [shape = 's32[1]{0}', space=sflag, size = 0x4, scoped, tag = 'scoped memory for tpu_custom_call.1']
    #allocation5 [shape = 'u8[8192]{0}', space=vmem, size = 0x2000, scoped, tag = 'output window, operand 0, single buffered']
    %9 = vsyncpa [#allocation3], 0
    %10 = vsyncpa [#allocation4], 0
    // Predicated region
    $region2: #{tpu_custom_call.1} parent=1 // pred_check
      _
    $region3: #{tpu_custom_call.1} parent=1 // pred_check_branch
      %12 = sbr.rel (0) target = $region5
    $region4: #{tpu_custom_call.1} parent=1 // pred_region
      _
    $region5: #{tpu_custom_call.1} parent=1 // pred_fallthru
      _
    // Predicated region
    $region6: #{tpu_custom_call.1} parent=1 // pred_check
      _
    $region7: #{tpu_custom_call.1} parent=1 // pred_check_branch
      %14 = sbr.rel (0) target = $region9
    $region8: #{tpu_custom_call.1} parent=1 // pred_region
      _
    $region9: #{tpu_custom_call.1} parent=1 // pred_fallthru
      _
    // Predicated region
    $region10: #{tpu_custom_call.1} parent=1 // pred_check
      _
    $region11: #{tpu_custom_call.1} parent=1 // pred_check_branch
      %16 = sbr.rel (0) target = $region13
    $region12: #{tpu_custom_call.1} parent=1 // pred_region
      %s18 = ssub.s32 256, 256
      %19 = vsyncadd [#allocation3], %s18
      %s21 = sshll.u32 [#allocation2], 4
      %s22 = int_to_ptr.vmem [resolvable:$true] %s21
      %24 = dma.hbm_to_vmem [thread:$0]  %s2, 256, %s22, [#allocation3]
    $region13: #{tpu_custom_call.1} parent=1 // pred_fallthru
      _
    // Predicated region
    $region14: #{tpu_custom_call.1} parent=1 // pred_check
      _
    $region15: #{tpu_custom_call.1} parent=1 // pred_check_branch
      %26 = sbr.rel (0) target = $region17
    $region16: #{tpu_custom_call.1} parent=1 // pred_region
      _
    $region17: #{tpu_custom_call.1} parent=1 // pred_fallthru
      _
    // Predicated region
    $region18: #{tpu_custom_call.1} parent=1 // pred_check
      _
    $region19: #{tpu_custom_call.1} parent=1 // pred_check_branch
      %28 = sbr.rel (0) target = $region21
    $region20: #{tpu_custom_call.1} parent=1 // pred_region
      %29 = dma.done [#allocation3], 256
    $region21: #{tpu_custom_call.1} parent=1 // pred_fallthru
      _
    %v30 = vld [vmem:[%s0] sm:$0x3]
    %v31 = vld [vmem:[%s1] sm:$0x3]
    %v32 = vld [vmem:[#allocation2] sm:$0xff]
    %v33 = vld [vmem:[#allocation2 + $0x8] sm:$0xff]
    %v34 = vld [vmem:[%s3] sm:$0xff]
    %v35 = vld [vmem:[%s3 + $0x8] sm:$0xff]
    %37 = vset.pattern.permute.xlu0 0
    %38 = vperm.xlu0 %37, %v30
    %v39 = vpop.permute.xlu0 %38
    %v43 = vcombine.high %v32, %v32
    %v45 = vunpack.c.l.s4 1983009808
    %v46 = vunpack.c.0.s8 %v45
    %v47 = vlaneseq
    %v48 = vshrl.u32 %v47, 7
    %v49 = vsub.s32 %v46, %v48
    %v50 = vrot.slane %v32, %v49
    %v52 = vunpack.c.l.s4 1983009808
    %v53 = vunpack.c.0.s8 %v52
    %v54 = vlaneseq
    %v55 = vshrl.u32 %v54, 7
    %v56 = vsub.s32 %v53, %v55
    %v57 = vrot.slane %v43, %v56
    %v58 = vcombine.high %v50, %v50
    %v59 = vcombine.high %v57, %v57
    %v60 = vcombine.high %v33, %v33
    %v62 = vunpack.c.l.s4 1983009808
    %v63 = vunpack.c.0.s8 %v62
    %v64 = vlaneseq
    %v65 = vshrl.u32 %v64, 7
    %v66 = vsub.s32 %v63, %v65
    %v67 = vrot.slane %v33, %v66
    %v69 = vunpack.c.l.s4 1983009808
    %v70 = vunpack.c.0.s8 %v69
    %v71 = vlaneseq
    %v72 = vshrl.u32 %v71, 7
    %v73 = vsub.s32 %v70, %v72
    %v74 = vrot.slane %v60, %v73
    %v75 = vcombine.high %v67, %v67
    %v76 = vcombine.high %v74, %v74
    %v85 = vmul.f32 %v39, %v50
    %v86 = vmul.f32 %v39, %v58
    %v87 = vmul.f32 %v39, %v57
    %v88 = vmul.f32 %v39, %v59
    %v89 = vmul.f32 %v39, %v67
    %v90 = vmul.f32 %v39, %v75
    %v91 = vmul.f32 %v39, %v74
    %v92 = vmul.f32 %v39, %v76
    %94 = vset.pattern.permute.xlu0 0
    %95 = vperm.xlu0 %94, %v31
    %v96 = vpop.permute.xlu0 %95
    %v100 = vcombine.high %v34, %v34
    %v102 = vunpack.c.l.s4 1983009808
    %v103 = vunpack.c.0.s8 %v102
    %v104 = vlaneseq
    %v105 = vshrl.u32 %v104, 7
    %v106 = vsub.s32 %v103, %v105
    %v107 = vrot.slane %v34, %v106
    %v109 = vunpack.c.l.s4 1983009808
    %v110 = vunpack.c.0.s8 %v109
    %v111 = vlaneseq
    %v112 = vshrl.u32 %v111, 7
    %v113 = vsub.s32 %v110, %v112
    %v114 = vrot.slane %v100, %v113
    %v115 = vcombine.high %v107, %v107
    %v116 = vcombine.high %v114, %v114
    %v117 = vcombine.high %v35, %v35
    %v119 = vunpack.c.l.s4 1983009808
    %v120 = vunpack.c.0.s8 %v119
    %v121 = vlaneseq
    %v122 = vshrl.u32 %v121, 7
    %v123 = vsub.s32 %v120, %v122
    %v124 = vrot.slane %v35, %v123
    %v126 = vunpack.c.l.s4 1983009808
    %v127 = vunpack.c.0.s8 %v126
    %v128 = vlaneseq
    %v129 = vshrl.u32 %v128, 7
    %v130 = vsub.s32 %v127, %v129
    %v131 = vrot.slane %v117, %v130
    %v132 = vcombine.high %v124, %v124
    %v133 = vcombine.high %v131, %v131
    %v142 = vmul.f32 %v96, %v107
    %v143 = vmul.f32 %v96, %v115
    %v144 = vmul.f32 %v96, %v114
    %v145 = vmul.f32 %v96, %v116
    %v146 = vmul.f32 %v96, %v124
    %v147 = vmul.f32 %v96, %v132
    %v148 = vmul.f32 %v96, %v131
    %v149 = vmul.f32 %v96, %v133
    %v150 = vadd.f32 %v85, %v142
    %v151 = vadd.f32 %v86, %v143
    %v152 = vadd.f32 %v87, %v144
    %v153 = vadd.f32 %v88, %v145
    %v154 = vadd.f32 %v89, %v146
    %v155 = vadd.f32 %v90, %v147
    %v156 = vadd.f32 %v91, %v148
    %v157 = vadd.f32 %v92, %v149
    %v166 = vcombine.low %v150, %v151
    %v167 = vcombine.low %v152, %v153
    %v169 = vunpack.c.l.s4 1983009808
    %v170 = vunpack.c.0.s8 %v169
    %v171 = vlaneseq
    %v172 = vshrl.u32 %v171, 7
    %v173 = vsub.s32 %v170, %v172
    %v174 = vrot.slane %v166, %v173
    %v176 = vunpack.c.l.s4 1983009808
    %v177 = vunpack.c.0.s8 %v176
    %v178 = vlaneseq
    %v179 = vshrl.u32 %v178, 7
    %v180 = vsub.s32 %v177, %v179
    %v181 = vrot.slane %v167, %v180
    %v182 = vcombine.low %v174, %v181
    %v183 = vcombine.low %v154, %v155
    %v184 = vcombine.low %v156, %v157
    %v186 = vunpack.c.l.s4 1983009808
    %v187 = vunpack.c.0.s8 %v186
    %v188 = vlaneseq
    %v189 = vshrl.u32 %v188, 7
    %v190 = vsub.s32 %v187, %v189
    %v191 = vrot.slane %v183, %v190
    %v193 = vunpack.c.l.s4 1983009808
    %v194 = vunpack.c.0.s8 %v193
    %v195 = vlaneseq
    %v196 = vshrl.u32 %v195, 7
    %v197 = vsub.s32 %v194, %v196
    %v198 = vrot.slane %v184, %v197
    %v199 = vcombine.low %v191, %v198
    %202 = vst [vmem:[#allocation5] sm:$0xff] %v182
    %203 = vst [vmem:[#allocation5 + $0x8] sm:$0xff] %v199
    // Predicated region
    $region22: #{tpu_custom_call.1} parent=1 // pred_check
      _
    $region23: #{tpu_custom_call.1} parent=1 // pred_check_branch
      %205 = sbr.rel (0) target = $region25
    $region24: #{tpu_custom_call.1} parent=1 // pred_region
      %s207 = ssub.s32 256, 256
      %208 = vsyncadd [#allocation4], %s207
      %s210 = sshll.u32 [#allocation5], 4
      %s211 = int_to_ptr.vmem [resolvable:$true] %s210
      %213 = dma.vmem_to_hbm [thread:$0]  %s211, 256, %s4, [#allocation4]
    $region25: #{tpu_custom_call.1} parent=1 // pred_fallthru
      _
    // Predicated region
    $region26: #{tpu_custom_call.1} parent=1 // pred_check
      _
    $region27: #{tpu_custom_call.1} parent=1 // pred_check_branch
      %215 = sbr.rel (0) target = $region29
    $region28: #{tpu_custom_call.1} parent=1 // pred_region
      %216 = dma.done [#allocation4], 256
    $region29: #{tpu_custom_call.1} parent=1 // pred_fallthru
      _
    %217 = vsyncpa [#allocation3], 1
    %218 = vsyncpa [#allocation4], 1

</llo_original>
